<compile_context>
chip_gen: v6e
topology: v6e:2x2x1
jax: 0.10.0
libtpu: 0.0.40
codegen_flags: <defaults>
</compile_context>

<pallas_src>
import jax
import jax.numpy as jnp
from jax.experimental import pallas as pl
from jax.experimental.pallas import tpu as pltpu


def _round_up(n, m):
    return ((n + m - 1) // m) * m


def _cdiv(a, b):
    return -(-a // b)


def dqn_kernel(x_ref, w1_ref, b1_ref, w2_ref, b2_ref, w3_ref, b3_ref, o_ref):
    # fc1 + tanh (f32 accumulation on the MXU, tanh on the EUP)
    h = jnp.tanh(
        jnp.dot(x_ref[...], w1_ref[...], preferred_element_type=jnp.float32)
        + b1_ref[...]
    )
    # fc2 + tanh
    h = jnp.tanh(
        jnp.dot(h.astype(w2_ref.dtype), w2_ref[...],
                preferred_element_type=jnp.float32)
        + b2_ref[...]
    )
    # out (no activation); output block is lane-dense (padded to 128 lanes)
    o_ref[...] = (
        jnp.dot(h.astype(w3_ref.dtype), w3_ref[...],
                preferred_element_type=jnp.float32)
        + b3_ref[...]
    ).astype(o_ref.dtype)


def prepare_params(params, compute_dtype=jnp.float32):
    """One-time prep: transpose weights to [in, out], reshape biases to [1, out],
    and zero-pad the final layer to a lane-dense 128-wide output.
    NOTE: if the model is ever scaled up, keep h1/h2 multiples of 128 so the
    tanh / bias-add vregs are lane-dense."""
    (w1, b1), (w2, b2), (w3, b3) = params["fc1"], params["fc2"], params["out"]
    out_actions = w3.shape[0]
    out_pad = _round_up(max(out_actions, 128), 128)  # exactly 128 for small nets

    w1t = w1.T.astype(compute_dtype)
    w2t = w2.T.astype(compute_dtype)
    w3t = (
        jnp.zeros((w3.shape[1], out_pad), compute_dtype)
        .at[:, :out_actions]
        .set(w3.T.astype(compute_dtype))
    )
    b1r = b1[None, :].astype(jnp.float32)
    b2r = b2[None, :].astype(jnp.float32)
    b3r = jnp.zeros((1, out_pad), jnp.float32).at[:, :out_actions].set(b3)

    return {
        "w1t": w1t, "b1r": b1r,
        "w2t": w2t, "b2r": b2r,
        "w3t": w3t, "b3r": b3r,
        "out_actions": out_actions,
        "out_pad": out_pad,
    }


def dqn_forward(x, prepped, *, max_batch_tile=4096, out_dtype=jnp.float32):
    """x: [B, in_states]. prepped: output of prepare_params."""
    B, in_states = x.shape
    out_actions = prepped["out_actions"]
    out_pad = prepped["out_pad"]
    compute_dtype = prepped["w1t"].dtype

    h1 = prepped["w1t"].shape[1]
    h2 = prepped["w2t"].shape[1]

    # Sublane-aligned batch tile: bf16 packs 16 rows per vreg, f32 packs 8.
    min_tile = 16 if jnp.dtype(compute_dtype) == jnp.dtype(jnp.bfloat16) else 8

    # Pick the number of grid steps first, then derive the tile size, so batch
    # padding is at most (min_tile - 1) rows instead of (TB - 1).
    n_tiles = max(1, _cdiv(B, max_batch_tile))
    if B >= 2 * min_tile:
        # >=2 steps so v7x's second TensorCore gets work; keep it even.
        n_tiles = max(n_tiles, 2)
        if n_tiles % 2:
            n_tiles += 1
    TB = _round_up(_cdiv(B, n_tiles), min_tile)
    B_pad = n_tiles * TB

    if B_pad != B:
        x = jnp.pad(x, ((0, B_pad - B), (0, 0)))
    if x.dtype != jnp.dtype(compute_dtype):
        # Prefer casting at the producer; only convert here if unavoidable.
        x = x.astype(compute_dtype)

    grid = (n_tiles,)

    itemsize = jnp.dtype(compute_dtype).itemsize
    out_itemsize = jnp.dtype(out_dtype).itemsize
    weight_bytes = sum(
        prepped[k].size * prepped[k].dtype.itemsize
        for k in ("w1t", "b1r", "w2t", "b2r", "w3t", "b3r")
    )
    cost = pl.CostEstimate(
        flops=2 * B_pad * (in_states * h1 + h1 * h2 + h2 * out_pad),
        transcendentals=B_pad * (h1 + h2),
        bytes_accessed=(B_pad * in_states * itemsize
                        + B_pad * out_pad * out_itemsize
                        + weight_bytes),
    )

    out_padded = pl.pallas_call(
        dqn_kernel,
        out_shape=jax.ShapeDtypeStruct((B_pad, out_pad), out_dtype),
        grid=grid,
        in_specs=[
            # streamed batch tile of activations (double-buffered by Pallas)
            pl.BlockSpec((TB, in_states), lambda i: (i, 0)),
            # weights/biases: constant block index -> resident in VMEM
            pl.BlockSpec((in_states, h1), lambda i: (0, 0)),
            pl.BlockSpec((1, h1), lambda i: (0, 0)),
            pl.BlockSpec((h1, h2), lambda i: (0, 0)),
            pl.BlockSpec((1, h2), lambda i: (0, 0)),
            pl.BlockSpec((h2, out_pad), lambda i: (0, 0)),
            pl.BlockSpec((1, out_pad), lambda i: (0, 0)),
        ],
        out_specs=pl.BlockSpec((TB, out_pad), lambda i: (i, 0)),
        compiler_params=pltpu.CompilerParams(
            dimension_semantics=("parallel",),
        ),
        cost_estimate=cost,
    )(
        x,
        prepped["w1t"], prepped["b1r"],
        prepped["w2t"], prepped["b2r"],
        prepped["w3t"], prepped["b3r"],
    )

    # Slice away batch padding and the lane padding of the output layer.
    return out_padded[:B, :out_actions]


def init_params(key, in_states, h1_nodes, out_actions):
    """Deterministic PyTorch-style (uniform +-1/sqrt(fan_in)) initialization."""
    def linear(key, fan_in, fan_out):
        kw, kb = jax.random.split(key)
        bound = 1.0 / jnp.sqrt(jnp.float32(fan_in))
        w = jax.random.uniform(kw, (fan_out, fan_in), jnp.float32, -bound, bound)
        b = jax.random.uniform(kb, (fan_out,), jnp.float32, -bound, bound)
        return w, b

    k1, k2, k3 = jax.random.split(key, 3)
    return {
        "fc1": linear(k1, in_states, h1_nodes),
        "fc2": linear(k2, h1_nodes, h1_nodes * 2),
        "out": linear(k3, h1_nodes * 2, out_actions),
    }


if __name__ == "__main__":
    in_states, h1_nodes, out_actions = 16, 32, 4
    batch = 8

    key = jax.random.PRNGKey(0)
    kx, kp = jax.random.split(key)
    x = jax.random.normal(kx, (batch, in_states), jnp.float32)
    params = init_params(kp, in_states, h1_nodes, out_actions)

    # One-time parameter prep (transposes / padding hoisted out of the call path).
    prepped = prepare_params(params, compute_dtype=jnp.float32)

    out = dqn_forward(x, prepped)
    out = jax.block_until_ready(out)

    # Pure-JAX reference check of the same forward pass.
    (w1, b1), (w2, b2), (w3, b3) = params["fc1"], params["fc2"], params["out"]
    ref = jnp.tanh(x @ w1.T + b1)
    ref = jnp.tanh(ref @ w2.T + b2)
    ref = ref @ w3.T + b3
    assert out.shape == (batch, out_actions)
    assert jnp.allclose(out, ref, atol=1e-5, rtol=1e-5)

    # Also exercise a larger, multi-tile batch (splits across >=2 grid steps,
    # odd size checks the padding path).
    xb = jax.random.normal(jax.random.PRNGKey(1), (1037, in_states), jnp.float32)
    outb = jax.block_until_ready(dqn_forward(xb, prepped))
    refb = jnp.tanh(xb @ w1.T + b1)
    refb = jnp.tanh(refb @ w2.T + b2)
    refb = refb @ w3.T + b3
    assert outb.shape == (1037, out_actions)
    assert jnp.allclose(outb, refb, atol=1e-5, rtol=1e-5)

    print("KERNEL_OK")
</pallas_src>

<mosaic_0001>
module attributes {stable_mosaic.version = 11 : i64} {
  func.func @dqn_kernel(%arg0: i32, %arg1: memref<8x16xf32, #tpu.memory_space<vmem>>, %arg2: memref<16x32xf32, #tpu.memory_space<vmem>>, %arg3: memref<1x32xf32, #tpu.memory_space<vmem>>, %arg4: memref<32x64xf32, #tpu.memory_space<vmem>>, %arg5: memref<1x64xf32, #tpu.memory_space<vmem>>, %arg6: memref<64x128xf32, #tpu.memory_space<vmem>>, %arg7: memref<1x128xf32, #tpu.memory_space<vmem>>, %arg8: memref<8x128xf32, #tpu.memory_space<vmem>>) attributes {dimension_semantics = [#tpu.dimension_semantics<parallel>], iteration_bounds = array<i64: 1>, scalar_prefetch = 0 : i64, scratch_operands = 0 : i64, tpu.core_type = #tpu.core_type<tc>, window_params = [{transform_indices = @transform_0, window_bounds = array<i64: 8, 16>}, {pipeline_mode = #tpu.pipeline_mode<synchronous>, transform_indices = @transform_1, window_bounds = array<i64: 16, 32>}, {pipeline_mode = #tpu.pipeline_mode<synchronous>, transform_indices = @transform_2, window_bounds = array<i64: 1, 32>}, {pipeline_mode = #tpu.pipeline_mode<synchronous>, transform_indices = @transform_3, window_bounds = array<i64: 32, 64>}, {pipeline_mode = #tpu.pipeline_mode<synchronous>, transform_indices = @transform_4, window_bounds = array<i64: 1, 64>}, {pipeline_mode = #tpu.pipeline_mode<synchronous>, transform_indices = @transform_5, window_bounds = array<i64: 64, 128>}, {pipeline_mode = #tpu.pipeline_mode<synchronous>, transform_indices = @transform_6, window_bounds = array<i64: 1, 128>}, {transform_indices = @transform_7, window_bounds = array<i64: 8, 128>}]} {
    %c0 = arith.constant 0 : index
    %c0_0 = arith.constant 0 : index
    %0 = vector.load %arg1[%c0, %c0_0] : memref<8x16xf32, #tpu.memory_space<vmem>>, vector<8x16xf32>
    %c0_1 = arith.constant 0 : index
    %c0_2 = arith.constant 0 : index
    %1 = vector.load %arg2[%c0_1, %c0_2] : memref<16x32xf32, #tpu.memory_space<vmem>>, vector<16x32xf32>
    %cst = arith.constant dense<0.000000e+00> : vector<8x32xf32>
    %2 = tpu.matmul %0, %1, %cst {dimension_numbers = #tpu.dot_dimension_numbers<[1], [0], [0], [1], [0, 0, 1, 1], [], []>} : vector<8x16xf32>, vector<16x32xf32>, vector<8x32xf32> -> vector<8x32xf32>
    %c0_3 = arith.constant 0 : index
    %c0_4 = arith.constant 0 : index
    %3 = vector.load %arg3[%c0_3, %c0_4] : memref<1x32xf32, #tpu.memory_space<vmem>>, vector<1x32xf32>
    %4 = vector.broadcast %3 : vector<1x32xf32> to vector<8x32xf32>
    %5 = arith.addf %2, %4 : vector<8x32xf32>
    %6 = math.tanh %5 : vector<8x32xf32>
    %c0_5 = arith.constant 0 : index
    %c0_6 = arith.constant 0 : index
    %7 = vector.load %arg4[%c0_5, %c0_6] : memref<32x64xf32, #tpu.memory_space<vmem>>, vector<32x64xf32>
    %cst_7 = arith.constant dense<0.000000e+00> : vector<8x64xf32>
    %8 = tpu.matmul %6, %7, %cst_7 {dimension_numbers = #tpu.dot_dimension_numbers<[1], [0], [0], [1], [0, 0, 1, 1], [], []>} : vector<8x32xf32>, vector<32x64xf32>, vector<8x64xf32> -> vector<8x64xf32>
    %c0_8 = arith.constant 0 : index
    %c0_9 = arith.constant 0 : index
    %9 = vector.load %arg5[%c0_8, %c0_9] : memref<1x64xf32, #tpu.memory_space<vmem>>, vector<1x64xf32>
    %10 = vector.broadcast %9 : vector<1x64xf32> to vector<8x64xf32>
    %11 = arith.addf %8, %10 : vector<8x64xf32>
    %12 = math.tanh %11 : vector<8x64xf32>
    %c0_10 = arith.constant 0 : index
    %c0_11 = arith.constant 0 : index
    %13 = vector.load %arg6[%c0_10, %c0_11] : memref<64x128xf32, #tpu.memory_space<vmem>>, vector<64x128xf32>
    %cst_12 = arith.constant dense<0.000000e+00> : vector<8x128xf32>
    %14 = tpu.matmul %12, %13, %cst_12 {dimension_numbers = #tpu.dot_dimension_numbers<[1], [0], [0], [1], [0, 0, 1, 1], [], []>} : vector<8x64xf32>, vector<64x128xf32>, vector<8x128xf32> -> vector<8x128xf32>
    %c0_13 = arith.constant 0 : index
    %c0_14 = arith.constant 0 : index
    %15 = vector.load %arg7[%c0_13, %c0_14] : memref<1x128xf32, #tpu.memory_space<vmem>>, vector<1x128xf32>
    %16 = vector.broadcast %15 : vector<1x128xf32> to vector<8x128xf32>
    %17 = arith.addf %14, %16 : vector<8x128xf32>
    %c0_15 = arith.constant 0 : index
    %c0_16 = arith.constant 0 : index
    %18 = vector.load %arg8[%c0_15, %c0_16] : memref<8x128xf32, #tpu.memory_space<vmem>>, vector<8x128xf32>
    tpu.vector_store %arg8[%c0_15, %c0_16], %17 {strides = array<i32>} : memref<8x128xf32, #tpu.memory_space<vmem>>, vector<8x128xf32>,
    return
  }
  func.func @transform_0(%arg0: i32) -> (i32, i32) {
    %c0_i32 = arith.constant 0 : i32
    %c0_i32_0 = arith.constant 0 : i32
    return %arg0, %c0_i32 : i32, i32
  }
  func.func @transform_1(%arg0: i32) -> (i32, i32) {
    %c0_i32 = arith.constant 0 : i32
    %c0_i32_0 = arith.constant 0 : i32
    %c0_i32_1 = arith.constant 0 : i32
    return %c0_i32, %c0_i32_0 : i32, i32
  }
  func.func @transform_2(%arg0: i32) -> (i32, i32) {
    %c0_i32 = arith.constant 0 : i32
    %c0_i32_0 = arith.constant 0 : i32
    %c0_i32_1 = arith.constant 0 : i32
    return %c0_i32, %c0_i32_0 : i32, i32
  }
  func.func @transform_3(%arg0: i32) -> (i32, i32) {
    %c0_i32 = arith.constant 0 : i32
    %c0_i32_0 = arith.constant 0 : i32
    %c0_i32_1 = arith.constant 0 : i32
    return %c0_i32, %c0_i32_0 : i32, i32
  }
  func.func @transform_4(%arg0: i32) -> (i32, i32) {
    %c0_i32 = arith.constant 0 : i32
    %c0_i32_0 = arith.constant 0 : i32
    %c0_i32_1 = arith.constant 0 : i32
    return %c0_i32, %c0_i32_0 : i32, i32
  }
  func.func @transform_5(%arg0: i32) -> (i32, i32) {
    %c0_i32 = arith.constant 0 : i32
    %c0_i32_0 = arith.constant 0 : i32
    %c0_i32_1 = arith.constant 0 : i32
    return %c0_i32, %c0_i32_0 : i32, i32
  }
  func.func @transform_6(%arg0: i32) -> (i32, i32) {
    %c0_i32 = arith.constant 0 : i32
    %c0_i32_0 = arith.constant 0 : i32
    %c0_i32_1 = arith.constant 0 : i32
    return %c0_i32, %c0_i32_0 : i32, i32
  }
  func.func @transform_7(%arg0: i32) -> (i32, i32) {
    %c0_i32 = arith.constant 0 : i32
    %c0_i32_0 = arith.constant 0 : i32
    return %arg0, %c0_i32 : i32, i32
  }
}

</mosaic_0001>

<llo_original>
// kernel: tpu_custom_call.1
$region0: #{tpu_custom_call.1}
  #allocation0 [shape = 'u32[]', space=smem, size = 0x4, offset = 0x4, fixed_abs, tag = 'smem constant byte address 0x4 - core index']
  #allocation1 [shape = 'u32[144,128]{1,0:T(1,128)}', space=vmem, size = 0x12000, scoped, tag = 'internal scratch']
  %s0 = inlined_call_operand.hbm [shape: f32[8,16], index: 0, kind: input, shape index: {}]
  %s1 = inlined_call_operand.hbm [shape: f32[16,32], index: 1, kind: input, shape index: {}]
  %s2 = inlined_call_operand.vmem [shape: f32[1,32], index: 2, kind: input, shape index: {}]
  %s3 = inlined_call_operand.hbm [shape: f32[32,64], index: 3, kind: input, shape index: {}]
  %s4 = inlined_call_operand.vmem [shape: f32[1,64], index: 4, kind: input, shape index: {}]
  %s5 = inlined_call_operand.hbm [shape: f32[64,128], index: 5, kind: input, shape index: {}]
  %s6 = inlined_call_operand.vmem [shape: f32[1,128], index: 6, kind: input, shape index: {}]
  %s7 = inlined_call_operand.hbm [shape: f32[8,128], index: 7, kind: output, shape index: {}]
  %s8 = sld [smem:[#allocation0]]
  $region54: #{tpu_custom_call.1} parent=0
    _
  %s10 = ssub.s32 1, %s8
  %s11 = scalar_select 0, %s10, %s8
  $region1: #{tpu_custom_call.1} parent=0
    #allocation2 [shape = 'u8[4096]{0}', space=vmem, size = 0x1000, scoped, tag = 'input window, operand 0, single buffered']
    #allocation3 [shape = 's32[1]{0}', space=sflag, size = 0x4, scoped, tag = 'scoped memory for tpu_custom_call.1']
    #allocation4 [shape = 's32[1]{0}', space=sflag, size = 0x4, scoped, tag = 'scoped memory for tpu_custom_call.1']
    #allocation5 [shape = 'u8[8192]{0}', space=vmem, size = 0x2000, scoped, tag = 'input window, operand 1, single buffered']
    #allocation6 [shape = 's32[1]{0}', space=sflag, size = 0x4, scoped, tag = 'scoped memory for tpu_custom_call.1']
    #allocation7 [shape = 'u8[16384]{0}', space=vmem, size = 0x4000, scoped, tag = 'input window, operand 3, single buffered']
    #allocation8 [shape = 'u8[32768]{0}', space=vmem, size = 0x8000, scoped, tag = 'input window, operand 5, single buffered']
    #allocation9 [shape = 's32[1]{0}', space=sflag, size = 0x4, scoped, tag = 'scoped memory for tpu_custom_call.1']
    #allocation10 [shape = 'u8[4096]{0}', space=vmem, size = 0x1000, scoped, tag = 'output window, operand 0, single buffered']
    %12 = vsyncpa [#allocation3], 0
    %13 = vsyncpa [#allocation6], 0
    %14 = vsyncpa [#allocation9], 0
    %15 = vsyncpa [#allocation4], 0
    // Predicated region
    $region2: #{tpu_custom_call.1} parent=1 // pred_check
      _
    $region3: #{tpu_custom_call.1} parent=1 // pred_check_branch
      %17 = sbr.rel (0) target = $region5
    $region4: #{tpu_custom_call.1} parent=1 // pred_region
      %s19 = ssub.s32 128, 128
      %20 = vsyncadd [#allocation3], %s19
      %s22 = sshll.u32 [#allocation2], 4
      %s23 = int_to_ptr.vmem [resolvable:$true] %s22
      %25 = dma.hbm_to_vmem [thread:$0]  %s0, 128, %s23, [#allocation3]
    $region5: #{tpu_custom_call.1} parent=1 // pred_fallthru
      _
    // Predicated region
    $region6: #{tpu_custom_call.1} parent=1 // pred_check
      _
    $region7: #{tpu_custom_call.1} parent=1 // pred_check_branch
      %27 = sbr.rel (0) target = $region9
    $region8: #{tpu_custom_call.1} parent=1 // pred_region
      %s29 = ssub.s32 256, 256
      %30 = vsyncadd [#allocation6], %s29
      %s31 = sshll.u32 [#allocation5], 4
      %s32 = int_to_ptr.vmem [resolvable:$true] %s31
      %37 = dma.hbm_to_vmem [thread:$0]  %s1, 256, %s32, [#allocation6], 128, 128, 8
    $region9: #{tpu_custom_call.1} parent=1 // pred_fallthru
      _
    // Predicated region
    $region10: #{tpu_custom_call.1} parent=1 // pred_check
      _
    $region11: #{tpu_custom_call.1} parent=1 // pred_check_branch
      %39 = sbr.rel (0) target = $region13
    $region12: #{tpu_custom_call.1} parent=1 // pred_region
      _
    $region13: #{tpu_custom_call.1} parent=1 // pred_fallthru
      _
    // Predicated region
    $region14: #{tpu_custom_call.1} parent=1 // pred_check
      _
    $region15: #{tpu_custom_call.1} parent=1 // pred_check_branch
      %41 = sbr.rel (0) target = $region17
    $region16: #{tpu_custom_call.1} parent=1 // pred_region
      %s43 = ssub.s32 512, 512
      %44 = vsyncadd [#allocation6], %s43
      %s45 = sshll.u32 [#allocation7], 4
      %s46 = int_to_ptr.vmem [resolvable:$true] %s45
      %51 = dma.hbm_to_vmem [thread:$0]  %s3, 512, %s46, [#allocation6], 128, 128, 8
    $region17: #{tpu_custom_call.1} parent=1 // pred_fallthru
      _
    // Predicated region
    $region18: #{tpu_custom_call.1} parent=1 // pred_check
      _
    $region19: #{tpu_custom_call.1} parent=1 // pred_check_branch
      %53 = sbr.rel (0) target = $region21
    $region20: #{tpu_custom_call.1} parent=1 // pred_region
      _
    $region21: #{tpu_custom_call.1} parent=1 // pred_fallthru
      _
    // Predicated region
    $region22: #{tpu_custom_call.1} parent=1 // pred_check
      _
    $region23: #{tpu_custom_call.1} parent=1 // pred_check_branch
      %55 = sbr.rel (0) target = $region25
    $region24: #{tpu_custom_call.1} parent=1 // pred_region
      %s57 = ssub.s32 1024, 1024
      %58 = vsyncadd [#allocation9], %s57
      %s59 = sshll.u32 [#allocation8], 4
      %s60 = int_to_ptr.vmem [resolvable:$true] %s59
      %65 = dma.hbm_to_vmem [thread:$0]  %s5, 1024, %s60, [#allocation9], 128, 128, 8
    $region25: #{tpu_custom_call.1} parent=1 // pred_fallthru
      _
    // Predicated region
    $region26: #{tpu_custom_call.1} parent=1 // pred_check
      _
    $region27: #{tpu_custom_call.1} parent=1 // pred_check_branch
      %67 = sbr.rel (0) target = $region29
    $region28: #{tpu_custom_call.1} parent=1 // pred_region
      _
    $region29: #{tpu_custom_call.1} parent=1 // pred_fallthru
      _
    // Predicated region
    $region30: #{tpu_custom_call.1} parent=1 // pred_check
      _
    $region31: #{tpu_custom_call.1} parent=1 // pred_check_branch
      %69 = sbr.rel (0) target = $region33
    $region32: #{tpu_custom_call.1} parent=1 // pred_region
      %70 = dma.done [#allocation3], 128
    $region33: #{tpu_custom_call.1} parent=1 // pred_fallthru
      _
    // Predicated region
    $region34: #{tpu_custom_call.1} parent=1 // pred_check
      _
    $region35: #{tpu_custom_call.1} parent=1 // pred_check_branch
      %72 = sbr.rel (0) target = $region37
    $region36: #{tpu_custom_call.1} parent=1 // pred_region
      %73 = dma.done [#allocation6], 256
    $region37: #{tpu_custom_call.1} parent=1 // pred_fallthru
      _
    // Predicated region
    $region38: #{tpu_custom_call.1} parent=1 // pred_check
      _
    $region39: #{tpu_custom_call.1} parent=1 // pred_check_branch
      %75 = sbr.rel (0) target = $region41
    $region40: #{tpu_custom_call.1} parent=1 // pred_region
      %76 = dma.done [#allocation6], 512
    $region41: #{tpu_custom_call.1} parent=1 // pred_fallthru
      _
    // Predicated region
    $region42: #{tpu_custom_call.1} parent=1 // pred_check
      _
    $region43: #{tpu_custom_call.1} parent=1 // pred_check_branch
      %78 = sbr.rel (0) target = $region45
    $region44: #{tpu_custom_call.1} parent=1 // pred_region
      %79 = dma.done [#allocation9], 1024
    $region45: #{tpu_custom_call.1} parent=1 // pred_fallthru
      _
    %v80 = vld [vmem:[#allocation2] sm:$0xff]
    %v81 = vld [vmem:[#allocation5] sm:$0xff]
    %v82 = vld [vmem:[#allocation5 + $0x8] sm:$0xff]
    %v83 = vld [vmem:[%s2] sm:$0x1]
    %v85 = vlaneseq
    %v86 = vshrl.u32 %v85, 7
    %v87 = vsub.s32 0, %v86
    %v88 = vrot.slane %v83, %v87
    %vm90 = vcmask 130048
    %v92 = vsel %vm90, %v80, 0
    %94 = vmatprep.subr.mxu0 0.0
    %95 = vmatpush1.msra.mxu0 0.0
    %96 = vmatprep.subr.mxu0 0.0
    %97 = vmatpush1.msra.mxu0 0.0
    %98 = vmatprep.subr.mxu0 0.0
    %99 = vmatpush1.msra.mxu0 0.0
    %100 = vmatprep.subr.mxu0 0.0
    %101 = vmatpush1.msra.mxu0 0.0
    %102 = vmatprep.subr.mxu0 0.0
    %103 = vmatpush1.msra.mxu0 0.0
    %104 = vmatprep.subr.mxu0 0.0
    %105 = vmatpush1.msra.mxu0 0.0
    %106 = vmatprep.subr.mxu0 0.0
    %107 = vmatpush1.msra.mxu0 0.0
    %108 = vmatprep.subr.mxu0 0.0
    %109 = vmatpush1.msra.mxu0 0.0
    %110 = vmatprep.subr.mxu0 0.0
    %111 = vmatpush1.msra.mxu0 0.0
    %112 = vmatprep.subr.mxu0 0.0
    %113 = vmatpush1.msra.mxu0 0.0
    %114 = vmatprep.subr.mxu0 0.0
    %115 = vmatpush1.msra.mxu0 0.0
    %116 = vmatprep.subr.mxu0 0.0
    %117 = vmatpush1.msra.mxu0 0.0
    %118 = vmatprep.subr.mxu0 0.0
    %119 = vmatpush1.msra.mxu0 0.0
    %120 = vmatprep.subr.mxu0 0.0
    %121 = vmatpush1.msra.mxu0 0.0
    %122 = vmatprep.subr.mxu0 0.0
    %123 = vmatpush1.msra.mxu0 %v82
    %124 = vmatprep.subr.mxu0 0.0
    %125 = vmatpush1.msra.mxu0 %v81
    %126 = vmatprep.subr.mxu0 0.0
    %127 = vmatpush2.msra.mxu0 0.0
    %128 = vmatprep.subr.mxu0 0.0
    %129 = vmatpush2.msra.mxu0 0.0
    %130 = vmatprep.subr.mxu0 0.0
    %131 = vmatpush2.msra.mxu0 0.0
    %132 = vmatprep.subr.mxu0 0.0
    %133 = vmatpush2.msra.mxu0 0.0
    %134 = vmatprep.subr.mxu0 0.0
    %135 = vmatpush2.msra.mxu0 0.0
    %136 = vmatprep.subr.mxu0 0.0
    %137 = vmatpush2.msra.mxu0 0.0
    %138 = vmatprep.subr.mxu0 0.0
    %139 = vmatpush2.msra.mxu0 0.0
    %140 = vmatprep.subr.mxu0 0.0
    %141 = vmatpush2.msra.mxu0 0.0
    %142 = vmatprep.subr.mxu0 0.0
    %143 = vmatpush2.msra.mxu0 0.0
    %144 = vmatprep.subr.mxu0 0.0
    %145 = vmatpush2.msra.mxu0 0.0
    %146 = vmatprep.subr.mxu0 0.0
    %147 = vmatpush2.msra.mxu0 0.0
    %148 = vmatprep.subr.mxu0 0.0
    %149 = vmatpush2.msra.mxu0 0.0
    %150 = vmatprep.subr.mxu0 0.0
    %151 = vmatpush2.msra.mxu0 0.0
    %152 = vmatprep.subr.mxu0 0.0
    %153 = vmatpush2.msra.mxu0 0.0
    %154 = vmatprep.subr.mxu0 0.0
    %155 = vmatpush2.msra.mxu0 0.0
    %156 = vmatprep.subr.mxu0 0.0
    %157 = vmatpush2.msra.mxu0 0.0
    %158 = vmatprep.mubr.f32.mxu0 0.0
    %159 = vmatmul.mubr.f32.gmra.mxu0 %v92
    %v160 = vpop.f32.mrf.mxu0
    %v161 = vadd.f32 %v88, %v160
    %v162 = vpop.f32.mrf.mxu0
    %163 = vdwg.mxu0
    %v164 = vtanh.pop %v161
    %v165 = vld [vmem:[#allocation7] sm:$0xff]
    %v166 = vld [vmem:[#allocation7 + $0x8] sm:$0xff]
    %v167 = vld [vmem:[#allocation7 + $0x10] sm:$0xff]
    %v168 = vld [vmem:[#allocation7 + $0x18] sm:$0xff]
    %v169 = vld [vmem:[%s4] sm:$0x1]
    %v171 = vlaneseq
    %v172 = vshrl.u32 %v171, 7
    %v173 = vsub.s32 0, %v172
    %v174 = vrot.slane %v169, %v173
    %vm176 = vcmask 261120
    %v178 = vsel %vm176, %v164, 0
    %180 = vmatprep.subr.mxu0 0.0
    %181 = vmatpush1.msra.mxu0 0.0
    %182 = vmatprep.subr.mxu0 0.0
    %183 = vmatpush1.msra.mxu0 0.0
    %184 = vmatprep.subr.mxu0 0.0
    %185 = vmatpush1.msra.mxu0 0.0
    %186 = vmatprep.subr.mxu0 0.0
    %187 = vmatpush1.msra.mxu0 0.0
    %188 = vmatprep.subr.mxu0 0.0
    %189 = vmatpush1.msra.mxu0 0.0
    %190 = vmatprep.subr.mxu0 0.0
    %191 = vmatpush1.msra.mxu0 0.0
    %192 = vmatprep.subr.mxu0 0.0
    %193 = vmatpush1.msra.mxu0 0.0
    %194 = vmatprep.subr.mxu0 0.0
    %195 = vmatpush1.msra.mxu0 0.0
    %196 = vmatprep.subr.mxu0 0.0
    %197 = vmatpush1.msra.mxu0 0.0
    %198 = vmatprep.subr.mxu0 0.0
    %199 = vmatpush1.msra.mxu0 0.0
    %200 = vmatprep.subr.mxu0 0.0
    %201 = vmatpush1.msra.mxu0 0.0
    %202 = vmatprep.subr.mxu0 0.0
    %203 = vmatpush1.msra.mxu0 0.0
    %204 = vmatprep.subr.mxu0 0.0
    %205 = vmatpush1.msra.mxu0 %v168
    %206 = vmatprep.subr.mxu0 0.0
    %207 = vmatpush1.msra.mxu0 %v167
    %208 = vmatprep.subr.mxu0 0.0
    %209 = vmatpush1.msra.mxu0 %v166
    %210 = vmatprep.subr.mxu0 0.0
    %211 = vmatpush1.msra.mxu0 %v165
    %212 = vmatprep.subr.mxu0 0.0
    %213 = vmatpush2.msra.mxu0 0.0
    %214 = vmatprep.subr.mxu0 0.0
    %215 = vmatpush2.msra.mxu0 0.0
    %216 = vmatprep.subr.mxu0 0.0
    %217 = vmatpush2.msra.mxu0 0.0
    %218 = vmatprep.subr.mxu0 0.0
    %219 = vmatpush2.msra.mxu0 0.0
    %220 = vmatprep.subr.mxu0 0.0
    %221 = vmatpush2.msra.mxu0 0.0
    %222 = vmatprep.subr.mxu0 0.0
    %223 = vmatpush2.msra.mxu0 0.0
    %224 = vmatprep.subr.mxu0 0.0
    %225 = vmatpush2.msra.mxu0 0.0
    %226 = vmatprep.subr.mxu0 0.0
    %227 = vmatpush2.msra.mxu0 0.0
    %228 = vmatprep.subr.mxu0 0.0
    %229 = vmatpush2.msra.mxu0 0.0
    %230 = vmatprep.subr.mxu0 0.0
    %231 = vmatpush2.msra.mxu0 0.0
    %232 = vmatprep.subr.mxu0 0.0
    %233 = vmatpush2.msra.mxu0 0.0
    %234 = vmatprep.subr.mxu0 0.0
    %235 = vmatpush2.msra.mxu0 0.0
    %236 = vmatprep.subr.mxu0 0.0
    %237 = vmatpush2.msra.mxu0 0.0
    %238 = vmatprep.subr.mxu0 0.0
    %239 = vmatpush2.msra.mxu0 0.0
    %240 = vmatprep.subr.mxu0 0.0
    %241 = vmatpush2.msra.mxu0 0.0
    %242 = vmatprep.subr.mxu0 0.0
    %243 = vmatpush2.msra.mxu0 0.0
    %244 = vmatprep.mubr.f32.mxu0 0.0
    %245 = vmatmul.mubr.f32.gmra.mxu0 %v178
    %v246 = vpop.f32.mrf.mxu0
    %v247 = vadd.f32 %v174, %v246
    %v248 = vpop.f32.mrf.mxu0
    %249 = vdwg.mxu0
    %v250 = vtanh.pop %v247
    %v251 = vld [vmem:[#allocation8] sm:$0xff]
    %v252 = vld [vmem:[#allocation8 + $0x8] sm:$0xff]
    %v253 = vld [vmem:[#allocation8 + $0x10] sm:$0xff]
    %v254 = vld [vmem:[#allocation8 + $0x18] sm:$0xff]
    %v255 = vld [vmem:[#allocation8 + $0x20] sm:$0xff]
    %v256 = vld [vmem:[#allocation8 + $0x28] sm:$0xff]
    %v257 = vld [vmem:[#allocation8 + $0x30] sm:$0xff]
    %v258 = vld [vmem:[#allocation8 + $0x38] sm:$0xff]
    %v259 = vld [vmem:[%s6] sm:$0x1]
    %v261 = vlaneseq
    %v262 = vshrl.u32 %v261, 7
    %v263 = vsub.s32 0, %v262
    %v264 = vrot.slane %v259, %v263
    %vm266 = vcmask 523264
    %v268 = vsel %vm266, %v250, 0
    %270 = vmatprep.subr.mxu0 0.0
    %271 = vmatpush1.msra.mxu0 0.0
    %272 = vmatprep.subr.mxu0 0.0
    %273 = vmatpush1.msra.mxu0 0.0
    %274 = vmatprep.subr.mxu0 0.0
    %275 = vmatpush1.msra.mxu0 0.0
    %276 = vmatprep.subr.mxu0 0.0
    %277 = vmatpush1.msra.mxu0 0.0
    %278 = vmatprep.subr.mxu0 0.0
    %279 = vmatpush1.msra.mxu0 0.0
    %280 = vmatprep.subr.mxu0 0.0
    %281 = vmatpush1.msra.mxu0 0.0
    %282 = vmatprep.subr.mxu0 0.0
    %283 = vmatpush1.msra.mxu0 0.0
    %284 = vmatprep.subr.mxu0 0.0
    %285 = vmatpush1.msra.mxu0 0.0
    %286 = vmatprep.subr.mxu0 0.0
    %287 = vmatpush1.msra.mxu0 %v258
    %288 = vmatprep.subr.mxu0 0.0
    %289 = vmatpush1.msra.mxu0 %v257
    %290 = vmatprep.subr.mxu0 0.0
    %291 = vmatpush1.msra.mxu0 %v256
    %292 = vmatprep.subr.mxu0 0.0
    %293 = vmatpush1.msra.mxu0 %v255
    %294 = vmatprep.subr.mxu0 0.0
    %295 = vmatpush1.msra.mxu0 %v254
    %296 = vmatprep.subr.mxu0 0.0
    %297 = vmatpush1.msra.mxu0 %v253
    %298 = vmatprep.subr.mxu0 0.0
    %299 = vmatpush1.msra.mxu0 %v252
    %300 = vmatprep.subr.mxu0 0.0
    %301 = vmatpush1.msra.mxu0 %v251
    %302 = vmatprep.subr.mxu0 0.0
    %303 = vmatpush2.msra.mxu0 0.0
    %304 = vmatprep.subr.mxu0 0.0
    %305 = vmatpush2.msra.mxu0 0.0
    %306 = vmatprep.subr.mxu0 0.0
    %307 = vmatpush2.msra.mxu0 0.0
    %308 = vmatprep.subr.mxu0 0.0
    %309 = vmatpush2.msra.mxu0 0.0
    %310 = vmatprep.subr.mxu0 0.0
    %311 = vmatpush2.msra.mxu0 0.0
    %312 = vmatprep.subr.mxu0 0.0
    %313 = vmatpush2.msra.mxu0 0.0
    %314 = vmatprep.subr.mxu0 0.0
    %315 = vmatpush2.msra.mxu0 0.0
    %316 = vmatprep.subr.mxu0 0.0
    %317 = vmatpush2.msra.mxu0 0.0
    %318 = vmatprep.subr.mxu0 0.0
    %319 = vmatpush2.msra.mxu0 0.0
    %320 = vmatprep.subr.mxu0 0.0
    %321 = vmatpush2.msra.mxu0 0.0
    %322 = vmatprep.subr.mxu0 0.0
    %323 = vmatpush2.msra.mxu0 0.0
    %324 = vmatprep.subr.mxu0 0.0
    %325 = vmatpush2.msra.mxu0 0.0
    %326 = vmatprep.subr.mxu0 0.0
    %327 = vmatpush2.msra.mxu0 0.0
    %328 = vmatprep.subr.mxu0 0.0
    %329 = vmatpush2.msra.mxu0 0.0
    %330 = vmatprep.subr.mxu0 0.0
    %331 = vmatpush2.msra.mxu0 0.0
    %332 = vmatprep.subr.mxu0 0.0
    %333 = vmatpush2.msra.mxu0 0.0
    %334 = vmatprep.mubr.f32.mxu0 0.0
    %335 = vmatmul.mubr.f32.gmra.mxu0 %v268
    %v336 = vpop.f32.mrf.mxu0
    %v337 = vadd.f32 %v264, %v336
    %v338 = vpop.f32.mrf.mxu0
    %339 = vdwg.mxu0
    %340 = vst [vmem:[#allocation10] sm:$0xff] %v337
    // Predicated region
    $region46: #{tpu_custom_call.1} parent=1 // pred_check
      _
    $region47: #{tpu_custom_call.1} parent=1 // pred_check_branch
      %342 = sbr.rel (0) target = $region49
    $region48: #{tpu_custom_call.1} parent=1 // pred_region
      %s344 = ssub.s32 128, 128
      %345 = vsyncadd [#allocation4], %s344
      %s347 = sshll.u32 [#allocation10], 4
      %s348 = int_to_ptr.vmem [resolvable:$true] %s347
      %350 = dma.vmem_to_hbm [thread:$0]  %s348, 128, %s7, [#allocation4]
    $region49: #{tpu_custom_call.1} parent=1 // pred_fallthru
      _
    // Predicated region
    $region50: #{tpu_custom_call.1} parent=1 // pred_check
      _
    $region51: #{tpu_custom_call.1} parent=1 // pred_check_branch
      %352 = sbr.rel (0) target = $region53
    $region52: #{tpu_custom_call.1} parent=1 // pred_region
      %353 = dma.done [#allocation4], 128
    $region53: #{tpu_custom_call.1} parent=1 // pred_fallthru
      _
    %354 = vsyncpa [#allocation3], 1
    %355 = vsyncpa [#allocation6], 1
    %356 = vsyncpa [#allocation9], 1
    %357 = vsyncpa [#allocation4], 1

</llo_original>
